<compile_context>
chip_gen: v6e
topology: v6e:2x2x1
jax: 0.10.0
libtpu: 0.0.40
codegen_flags: <defaults>
</compile_context>

<pallas_src>
import math

import jax
import jax.numpy as jnp
from jax.experimental import pallas as pl
from jax.experimental.pallas import tpu as pltpu


def _add_bias_kernel(x_ref, b_ref, o_ref):
    # x_ref: (TM, TL); b_ref: (1, TL) row bias broadcast over rows.
    # Pure VPU elementwise add; the kernel is HBM-bandwidth bound.
    o_ref[...] = x_ref[...] + b_ref[...]


def _tpu_tile_params():
    """(target_bytes per tile, vmem_limit_bytes) by TPU generation."""
    kind = ""
    try:
        kind = jax.devices()[0].device_kind.lower()
    except Exception:
        pass
    if "v5 lite" in kind or "v5e" in kind or "v5lite" in kind:
        # ~0.82 TB/s HBM: 2 MiB tiles already amortize the per-step overhead;
        # keep VMEM pressure modest (16 MiB scoped default, raise a little).
        return 2 << 20, 32 << 20
    if "v7" in kind:
        # 3.2 TB/s HBM makes the ~0.35 us/step cost a real tax at 2 MiB tiles;
        # 6 MiB tiles, explicit 48 MiB limit (64 MiB physical per TC).
        return 6 << 20, 48 << 20
    if "v6" in kind:
        # 1.3-1.4 TB/s HBM, 128 MiB VMEM: larger tiles are effectively free.
        return 6 << 20, 64 << 20
    return 4 << 20, 48 << 20  # unknown generation: conservative middle ground


def _tile_shape(r, l, itemsize, target_bytes):
    """Pick (TM, TL) so a tile never exceeds ~target_bytes.

    TM is a multiple of the sublane packing (or the full row extent); TL is a
    multiple of 128 (or the full lane extent).  Very wide last dims get a
    lane-tiling axis instead of silently blowing the scoped-VMEM budget.
    """
    sublane = max(8, 32 // max(1, itemsize))  # 8 for f32, 16 bf16, 32 int8
    lane_bytes = l * itemsize
    if l <= 128 or sublane * lane_bytes <= target_bytes:
        tl = l
        rows = target_bytes // max(1, lane_bytes)
        rows = max(sublane, (rows // sublane) * sublane)
        tm = r if rows >= r else rows
    else:
        tm = r if r < sublane else sublane
        lanes = (target_bytes // max(1, tm * itemsize)) // 128 * 128
        lanes = max(128, lanes)
        tl = l if lanes >= l else lanes
    return int(tm), int(tl)


def _pallas_add_2d(x2, b2, *, donate=False):
    """x2: (R, L); b2: (1, L) row bias broadcast over rows."""
    r, l = x2.shape
    itemsize = jnp.dtype(x2.dtype).itemsize
    target_bytes, vmem_limit = _tpu_tile_params()
    tm, tl = _tile_shape(r, l, itemsize, target_bytes)
    grid = (pl.cdiv(r, tm), pl.cdiv(l, tl))

    kwargs = {}
    if donate:
        # Only when the caller can donate x: write the result in place.
        kwargs["input_output_aliases"] = {0: 0}

    return pl.pallas_call(
        _add_bias_kernel,
        out_shape=jax.ShapeDtypeStruct((r, l), x2.dtype),
        grid=grid,
        in_specs=[
            pl.BlockSpec((tm, tl), lambda i, j: (i, j)),
            # Row bias: constant along the row axis -> VMEM-resident across
            # row steps; follows the lane axis only when L is lane-tiled.
            pl.BlockSpec((1, tl), lambda i, j: (0, j)),
        ],
        out_specs=pl.BlockSpec((tm, tl), lambda i, j: (i, j)),
        compiler_params=pltpu.CompilerParams(
            dimension_semantics=("parallel", "parallel"),
            vmem_limit_bytes=vmem_limit,
        ),
        cost_estimate=pl.CostEstimate(
            flops=r * l,
            transcendentals=0,
            bytes_accessed=(2 * r * l + l) * itemsize,
        ),
        **kwargs,
    )(x2, b2)


_MAX_FOLD_LANES = 16384  # cap on the folded lane extent for the 2-D path


def add_bias(x, bias_param, *, donate=False):
    """Pallas equivalent of AddBias.forward.

    bias_param has shape (C, 1), matching nn.Parameter(bias.unsqueeze(1)).
    x is either (N, C) or (N, C, H, W) (NCHW, like PyTorch).
    """
    assert bias_param.ndim == 2 and bias_param.shape[1] == 1
    c = bias_param.shape[0]
    bias_vec = bias_param.reshape(c).astype(x.dtype)

    if x.ndim == 2:
        n = x.shape[0]
        assert x.shape[1] == c
        # Lane-densify: view (N, C) as (N/k, k*C) with k*C a multiple of 128
        # (pure row-major reshape, zero data movement).  Pad N up to a
        # multiple of k when needed — a few padded rows are far cheaper than
        # masked stores at C/128 lane utilization for small C.
        k = 128 // math.gcd(c, 128)
        if k > 1 and k * c <= _MAX_FOLD_LANES:
            while n % (2 * k) == 0 and 2 * k * c <= _MAX_FOLD_LANES:
                k *= 2
            pad = (-n) % k
            xp = jnp.pad(x, ((0, pad), (0, 0))) if pad else x
            rp = n + pad
            x2 = xp.reshape(rp // k, k * c)
            b2 = jnp.tile(bias_vec, k).reshape(1, k * c)
            out2 = _pallas_add_2d(x2, b2, donate=donate and pad == 0)
            out = out2.reshape(rp, c)
            return out[:n] if pad else out
        # C already a multiple of 128 (or large): plain layout is lane-dense.
        return _pallas_add_2d(x, bias_vec.reshape(1, c), donate=donate)

    if x.ndim == 4:
        n, cc, h, w = x.shape
        assert cc == c
        hw = h * w
        # Transpose-free, lane-dense view: NCHW -> (N, C*H*W).  The bias
        # becomes one VMEM-resident row (each channel value repeated H*W
        # times), so there is no per-step (TM, 1) bias DMA and stores are
        # unmasked even when H*W is small or not a multiple of 128.  Very
        # wide C*H*W is handled by the lane-tiling axis in _pallas_add_2d.
        x2 = x.reshape(n, c * hw)
        b2 = jnp.repeat(bias_vec, hw).reshape(1, c * hw)
        out2 = _pallas_add_2d(x2, b2, donate=donate)
        return out2.reshape(n, c, h, w)

    raise ValueError("AddBias supports 2-D or 4-D inputs only")


if __name__ == "__main__":
    key = jax.random.PRNGKey(0)
    k_bias, k_x2, k_x2b, k_x4 = jax.random.split(key, 4)

    C = 4
    # Deterministic parameter init: bias vector (C,) stored as (C, 1),
    # like nn.Parameter(bias.unsqueeze(1)).
    bias_vec = jax.random.normal(k_bias, (C,), dtype=jnp.float32)
    bias_param = bias_vec[:, None]

    # 2-D case, small batch (exercises the pad-to-multiple-of-k fold).
    x2d = jax.random.normal(k_x2, (8, C), dtype=jnp.float32)
    ref2d = x2d + bias_vec.reshape(1, C)
    out2d = jax.block_until_ready(add_bias(x2d, bias_param))
    assert out2d.shape == x2d.shape
    assert jnp.allclose(out2d, ref2d, atol=1e-6), "2-D (small) mismatch"

    # 2-D case, larger batch (fold without padding).
    x2db = jax.random.normal(k_x2b, (128, C), dtype=jnp.float32)
    ref2db = x2db + bias_vec.reshape(1, C)
    out2db = jax.block_until_ready(add_bias(x2db, bias_param))
    assert jnp.allclose(out2db, ref2db, atol=1e-6), "2-D (large) mismatch"

    # 4-D case: (N, C, H, W) NCHW, transpose-free resident-row-bias path.
    x4d = jax.random.normal(k_x4, (2, C, 16, 16), dtype=jnp.float32)
    ref4d = x4d + bias_vec.reshape(1, C, 1, 1)
    out4d = jax.block_until_ready(add_bias(x4d, bias_param))
    assert jnp.allclose(out4d, ref4d, atol=1e-6), "4-D mismatch"

    print("KERNEL_OK")
</pallas_src>

<mosaic_0001>
module attributes {stable_mosaic.version = 11 : i64} {
  func.func @_add_bias_kernel(%arg0: i32, %arg1: i32, %arg2: memref<1x128xf32, #tpu.memory_space<vmem>>, %arg3: memref<1x128xf32, #tpu.memory_space<vmem>>, %arg4: memref<1x128xf32, #tpu.memory_space<vmem>>) attributes {dimension_semantics = [#tpu.dimension_semantics<parallel>, #tpu.dimension_semantics<parallel>], iteration_bounds = array<i64: 1, 1>, scalar_prefetch = 0 : i64, scratch_operands = 0 : i64, tpu.core_type = #tpu.core_type<tc>, window_params = [{transform_indices = @transform_0, window_bounds = array<i64: 1, 128>}, {transform_indices = @transform_1, window_bounds = array<i64: 1, 128>}, {transform_indices = @transform_2, window_bounds = array<i64: 1, 128>}]} {
    %c0 = arith.constant 0 : index
    %c0_0 = arith.constant 0 : index
    %0 = vector.load %arg2[%c0, %c0_0] : memref<1x128xf32, #tpu.memory_space<vmem>>, vector<1x128xf32>
    %c0_1 = arith.constant 0 : index
    %c0_2 = arith.constant 0 : index
    %1 = vector.load %arg3[%c0_1, %c0_2] : memref<1x128xf32, #tpu.memory_space<vmem>>, vector<1x128xf32>
    %2 = arith.addf %0, %1 : vector<1x128xf32>
    %c0_3 = arith.constant 0 : index
    %c0_4 = arith.constant 0 : index
    %3 = vector.load %arg4[%c0_3, %c0_4] : memref<1x128xf32, #tpu.memory_space<vmem>>, vector<1x128xf32>
    tpu.vector_store %arg4[%c0_3, %c0_4], %2 {strides = array<i32>} : memref<1x128xf32, #tpu.memory_space<vmem>>, vector<1x128xf32>,
    return
  }
  func.func @transform_0(%arg0: i32, %arg1: i32) -> (i32, i32) {
    %c0_i32 = arith.constant 0 : i32
    return %arg0, %arg1 : i32, i32
  }
  func.func @transform_1(%arg0: i32, %arg1: i32) -> (i32, i32) {
    %c0_i32 = arith.constant 0 : i32
    %c0_i32_0 = arith.constant 0 : i32
    return %c0_i32, %arg1 : i32, i32
  }
  func.func @transform_2(%arg0: i32, %arg1: i32) -> (i32, i32) {
    %c0_i32 = arith.constant 0 : i32
    return %arg0, %arg1 : i32, i32
  }
}

</mosaic_0001>

<llo_original>
// kernel: tpu_custom_call.1
$region0: #{tpu_custom_call.1}
  #allocation0 [shape = 'u32[]', space=smem, size = 0x4, offset = 0x4, fixed_abs, tag = 'smem constant byte address 0x4 - core index']
  #allocation1 [shape = 'u32[144,128]{1,0:T(1,128)}', space=vmem, size = 0x12000, scoped, tag = 'internal scratch']
  %s0 = inlined_call_operand.hbm [shape: f32[1,128], index: 0, kind: input, shape index: {}]
  %s1 = inlined_call_operand.vmem [shape: f32[1,128], index: 1, kind: input, shape index: {}]
  %s2 = inlined_call_operand.hbm [shape: f32[1,128], index: 2, kind: output, shape index: {}]
  %s3 = sld [smem:[#allocation0]]
  $region22: #{tpu_custom_call.1} parent=0
    _
  %s5 = ssub.s32 1, %s3
  %s6 = scalar_select 0, %s5, %s3
  $region1: #{tpu_custom_call.1} parent=0
    #allocation2 [shape = 'u8[512]{0}', space=vmem, size = 0x400, scoped, tag = 'input window, operand 0, single buffered']
    #allocation3 [shape = 's32[1]{0}', space=sflag, size = 0x4, scoped, tag = 'scoped memory for tpu_custom_call.1']
    #allocation4 [shape = 's32[1]{0}', space=sflag, size = 0x4, scoped, tag = 'scoped memory for tpu_custom_call.1']
    #allocation5 [shape = 'u8[512]{0}', space=vmem, size = 0x400, scoped, tag = 'output window, operand 0, single buffered']
    %7 = vsyncpa [#allocation3], 0
    %8 = vsyncpa [#allocation4], 0
    // Predicated region
    $region2: #{tpu_custom_call.1} parent=1 // pred_check
      _
    $region3: #{tpu_custom_call.1} parent=1 // pred_check_branch
      %10 = sbr.rel (0) target = $region5
    $region4: #{tpu_custom_call.1} parent=1 // pred_region
      %s12 = ssub.s32 16, 16
      %13 = vsyncadd [#allocation3], %s12
      %s15 = sshll.u32 [#allocation2], 4
      %s16 = int_to_ptr.vmem [resolvable:$true] %s15
      %18 = dma.hbm_to_vmem [thread:$0]  %s0, 16, %s16, [#allocation3]
    $region5: #{tpu_custom_call.1} parent=1 // pred_fallthru
      _
    // Predicated region
    $region6: #{tpu_custom_call.1} parent=1 // pred_check
      _
    $region7: #{tpu_custom_call.1} parent=1 // pred_check_branch
      %20 = sbr.rel (0) target = $region9
    $region8: #{tpu_custom_call.1} parent=1 // pred_region
      _
    $region9: #{tpu_custom_call.1} parent=1 // pred_fallthru
      _
    // Predicated region
    $region10: #{tpu_custom_call.1} parent=1 // pred_check
      _
    $region11: #{tpu_custom_call.1} parent=1 // pred_check_branch
      %22 = sbr.rel (0) target = $region13
    $region12: #{tpu_custom_call.1} parent=1 // pred_region
      %23 = dma.done [#allocation3], 16
    $region13: #{tpu_custom_call.1} parent=1 // pred_fallthru
      _
    %v24 = vld [vmem:[#allocation2] sm:$0x1]
    %v25 = vld [vmem:[%s1] sm:$0x1]
    %v26 = vadd.f32 %v24, %v25
    %27 = vst [vmem:[#allocation5] sm:$0x1] %v26
    // Predicated region
    $region14: #{tpu_custom_call.1} parent=1 // pred_check
      _
    $region15: #{tpu_custom_call.1} parent=1 // pred_check_branch
      %29 = sbr.rel (0) target = $region17
    $region16: #{tpu_custom_call.1} parent=1 // pred_region
      %s31 = ssub.s32 16, 16
      %32 = vsyncadd [#allocation4], %s31
      %s34 = sshll.u32 [#allocation5], 4
      %s35 = int_to_ptr.vmem [resolvable:$true] %s34
      %37 = dma.vmem_to_hbm [thread:$0]  %s35, 16, %s2, [#allocation4]
    $region17: #{tpu_custom_call.1} parent=1 // pred_fallthru
      _
    // Predicated region
    $region18: #{tpu_custom_call.1} parent=1 // pred_check
      _
    $region19: #{tpu_custom_call.1} parent=1 // pred_check_branch
      %39 = sbr.rel (0) target = $region21
    $region20: #{tpu_custom_call.1} parent=1 // pred_region
      %40 = dma.done [#allocation4], 16
    $region21: #{tpu_custom_call.1} parent=1 // pred_fallthru
      _
    %41 = vsyncpa [#allocation3], 1
    %42 = vsyncpa [#allocation4], 1

</llo_original>
